<compile_context>
chip_gen: v7x
topology: tpu7x:2x2x1
jax: 0.10.0
libtpu: 0.0.40
codegen_flags: <defaults>
</compile_context>

<pallas_src>
import functools
import math

import jax
import jax.numpy as jnp
from jax.experimental import pallas as pl
from jax.experimental.pallas import tpu as pltpu


def _channel_attention_kernel(w1t_ref, b1_ref, w2_ref, b2_ref, x_ref, o_ref,
                              *, hw_actual):
    # w1t_ref: (C, hidden) f32   -- first Linear weight, pre-transposed
    # b1_ref : (1, hidden) f32
    # w2_ref : (C, hidden) f32   -- second Linear weight (native layout)
    # b2_ref : (C, 1)      f32
    # x_ref  : (nb, C, HW_pad)   -- lane-dense input block (native dtype)
    # o_ref  : (nb, C, HW_pad)
    x_nat = x_ref[...]                                    # (nb, C, HW_pad)
    hw_pad = x_nat.shape[-1]

    # ---- global spatial pooling (lane-axis reductions), accumulated in f32 ----
    xf = x_nat.astype(jnp.float32)
    # Padded lanes (if any) are zero, so the sum is exact; divide by true HW.
    avg_p = jnp.sum(xf, axis=-1, keepdims=True) * (1.0 / hw_actual)   # (nb, C, 1)
    if hw_pad != hw_actual:
        lane = jax.lax.broadcasted_iota(jnp.int32, xf.shape, 2)
        xf_for_max = jnp.where(lane < hw_actual, xf, -jnp.inf)
    else:
        xf_for_max = xf
    max_p = jnp.max(xf_for_max, axis=-1, keepdims=True)               # (nb, C, 1)

    # ---- tiny shared MLP (VPU/XLU only; far too small for the MXU) ----
    w1t = w1t_ref[...]                                    # (C, hidden)
    b1 = b1_ref[...]                                      # (1, hidden)
    w2 = w2_ref[...]                                      # (C, hidden)
    b2 = b2_ref[...]                                      # (C, 1)

    def mlp(p):                                           # p: (nb, C, 1) f32
        # Layer 1: h[b, j] = sum_c W1[j, c] * p[b, c]  -> sublane reduce.
        h = jnp.sum(w1t * p, axis=1, keepdims=True) + b1  # (nb, 1, hidden)
        h = jnp.maximum(h, 0.0)                           # ReLU
        # Layer 2: o[b, c] = sum_j W2[c, j] * h[b, j]  -> lane reduce.
        return jnp.sum(w2 * h, axis=-1, keepdims=True) + b2  # (nb, C, 1)

    gate = jax.nn.sigmoid(mlp(avg_p) + mlp(max_p))        # (nb, C, 1) f32

    # Gating multiply in the native input dtype (no full-block f32 intermediate
    # kept live for the store); gate broadcasts over the lane-dense HW axis.
    o_ref[...] = x_nat * gate.astype(x_nat.dtype)


@jax.jit
def channel_attention(x, w1, b1, w2, b2):
    """x: (N, C, H, W).  w1: (hidden, C), b1: (hidden,), w2: (C, hidden), b2: (C,)."""
    N, C, H, W = x.shape
    hidden = w1.shape[0]
    HW = H * W

    # Lane-dense layout: free/contiguous reshape to (N, C, H*W). Pad the lane
    # axis to a 128 multiple so the big stores are unmasked full-width vst.
    HW_pad = HW if HW % 128 == 0 else ((HW + 127) // 128) * 128
    x2 = x.reshape(N, C, HW)
    if HW_pad != HW:
        x2 = jnp.pad(x2, ((0, 0), (0, 0), (0, HW_pad - HW)))

    # ---- block-size / grid selection -------------------------------------
    per_img_native = C * HW_pad * x.dtype.itemsize
    per_img_f32 = C * HW_pad * 4
    vmem_limit = 32 << 20          # explicit; fits v5e/v6e (128 MiB) and v7x (64 MiB)
    budget = 20 << 20              # working-set target, headroom inside vmem_limit

    def footprint(nb):             # 2x-buffered in + out, + f32 pooling working set
        return nb * (4 * per_img_native + 2 * per_img_f32)

    nb_budget = 1
    while nb_budget < N and footprint(nb_budget + 1) <= budget:
        nb_budget += 1
    # Keep >= min(N, 4) grid steps so the pipeline overlaps DMA with compute and
    # dimension_semantics=("parallel",) can shard the grid across TCs (v7x).
    target_steps = min(N, 4)
    nb_steps_cap = max(1, (N + target_steps - 1) // target_steps)
    nb = max(1, min(nb_budget, nb_steps_cap))
    grid = (pl.cdiv(N, nb),)       # partial last batch block is masked by Pallas
    # TODO(synk): add an HW-tiled two-pass path (accumulate per-channel sum/max
    # over an "arbitrary" HW grid axis, then apply the gate) for single images
    # whose (C, HW) slab alone exceeds the VMEM budget (e.g. C>=1024, HW>=3136).

    # Tiny weights: lay them out once in f32 so the kernel needs no transposes,
    # only broadcast-multiply + lane/sublane reductions.
    w1t = jnp.asarray(w1, jnp.float32).T                   # (C, hidden)
    b1r = jnp.asarray(b1, jnp.float32).reshape(1, hidden)  # (1, hidden)
    w2c = jnp.asarray(w2, jnp.float32)                     # (C, hidden)
    b2c = jnp.asarray(b2, jnp.float32).reshape(C, 1)       # (C, 1)

    kernel = functools.partial(_channel_attention_kernel, hw_actual=HW)

    out2 = pl.pallas_call(
        kernel,
        out_shape=jax.ShapeDtypeStruct((N, C, HW_pad), x.dtype),
        grid_spec=pltpu.PrefetchScalarGridSpec(
            num_scalar_prefetch=0,
            grid=grid,
            in_specs=[
                pl.BlockSpec((C, hidden), lambda n: (0, 0)),        # w1t
                pl.BlockSpec((1, hidden), lambda n: (0, 0)),        # b1
                pl.BlockSpec((C, hidden), lambda n: (0, 0)),        # w2
                pl.BlockSpec((C, 1), lambda n: (0, 0)),             # b2
                pl.BlockSpec((nb, C, HW_pad), lambda n: (n, 0, 0)),  # x
            ],
            out_specs=pl.BlockSpec((nb, C, HW_pad), lambda n: (n, 0, 0)),
        ),
        compiler_params=pltpu.CompilerParams(
            dimension_semantics=("parallel",),
            vmem_limit_bytes=vmem_limit),
    )(w1t, b1r, w2c, b2c, x2)

    if HW_pad != HW:
        out2 = out2[:, :, :HW]
    return out2.reshape(N, C, H, W)


def _reference(x, w1, b1, w2, b2):
    """Pure-JAX port of the PyTorch forward, for a correctness check."""
    avg = jnp.mean(x, axis=(2, 3))                        # (N, C)
    mx = jnp.max(x, axis=(2, 3))                          # (N, C)

    def mlp(p):
        h = jnp.maximum(p @ w1.T + b1, 0.0)
        return h @ w2.T + b2

    gate = jax.nn.sigmoid(mlp(avg) + mlp(mx))             # (N, C)
    return x * gate[:, :, None, None]


if __name__ == "__main__":
    # Small shapes consistent with the module: channels must satisfy
    # channels // reduction_ratio >= 1 (default reduction_ratio = 16).
    N, C, H, W = 2, 32, 16, 16
    reduction_ratio = 16
    hidden = C // reduction_ratio                         # 2

    key = jax.random.PRNGKey(0)
    kx, k1, k2, k3, k4 = jax.random.split(key, 5)
    x = jax.random.normal(kx, (N, C, H, W), dtype=jnp.float32)

    # PyTorch nn.Linear default init: U(-1/sqrt(fan_in), 1/sqrt(fan_in)).
    bound1 = 1.0 / math.sqrt(C)
    w1 = jax.random.uniform(k1, (hidden, C), jnp.float32, -bound1, bound1)
    b1 = jax.random.uniform(k2, (hidden,), jnp.float32, -bound1, bound1)
    bound2 = 1.0 / math.sqrt(hidden)
    w2 = jax.random.uniform(k3, (C, hidden), jnp.float32, -bound2, bound2)
    b2 = jax.random.uniform(k4, (C,), jnp.float32, -bound2, bound2)

    out = channel_attention(x, w1, b1, w2, b2)
    out = jax.block_until_ready(out)

    ref = _reference(x, w1, b1, w2, b2)
    assert out.shape == (N, C, H, W)
    assert jnp.allclose(out, ref, atol=1e-5, rtol=1e-5)

    print("KERNEL_OK")
</pallas_src>

<mosaic_0001>
module attributes {stable_mosaic.version = 11 : i64} {
  func.func @_channel_attention_kernel(%arg0: i32, %arg1: memref<32x2xf32, #tpu.memory_space<vmem>>, %arg2: memref<1x2xf32, #tpu.memory_space<vmem>>, %arg3: memref<32x2xf32, #tpu.memory_space<vmem>>, %arg4: memref<32x1xf32, #tpu.memory_space<vmem>>, %arg5: memref<1x32x256xf32, #tpu.memory_space<vmem>>, %arg6: memref<1x32x256xf32, #tpu.memory_space<vmem>>) attributes {dimension_semantics = [#tpu.dimension_semantics<parallel>], iteration_bounds = array<i64: 2>, scalar_prefetch = 0 : i64, scratch_operands = 0 : i64, tpu.core_type = #tpu.core_type<tc>, window_params = [{pipeline_mode = #tpu.pipeline_mode<synchronous>, transform_indices = @transform_0, window_bounds = array<i64: 32, 2>}, {pipeline_mode = #tpu.pipeline_mode<synchronous>, transform_indices = @transform_1, window_bounds = array<i64: 1, 2>}, {pipeline_mode = #tpu.pipeline_mode<synchronous>, transform_indices = @transform_2, window_bounds = array<i64: 32, 2>}, {pipeline_mode = #tpu.pipeline_mode<synchronous>, transform_indices = @transform_3, window_bounds = array<i64: 32, 1>}, {transform_indices = @transform_4, window_bounds = array<i64: 1, 32, 256>}, {transform_indices = @transform_5, window_bounds = array<i64: 1, 32, 256>}]} {
    %c0 = arith.constant 0 : index
    %c0_0 = arith.constant 0 : index
    %c0_1 = arith.constant 0 : index
    %0 = vector.load %arg5[%c0, %c0_0, %c0_1] : memref<1x32x256xf32, #tpu.memory_space<vmem>>, vector<1x32x256xf32>
    %cst = arith.constant dense<0.000000e+00> : vector<1x32xf32>
    %1 = vector.multi_reduction <add>, %0, %cst [2] : vector<1x32x256xf32> to vector<1x32xf32>
    %2 = vector.shape_cast %1 : vector<1x32xf32> to vector<1x32x1xf32>
    %cst_2 = arith.constant 3.906250e-03 : f32
    %3 = vector.broadcast %cst_2 : f32 to vector<1x32x1xf32>
    %4 = arith.mulf %2, %3 : vector<1x32x1xf32>
    %cst_3 = arith.constant dense<0xFF800000> : vector<1x32xf32>
    %5 = vector.multi_reduction <maximumf>, %0, %cst_3 [2] : vector<1x32x256xf32> to vector<1x32xf32>
    %6 = vector.shape_cast %5 : vector<1x32xf32> to vector<1x32x1xf32>
    %c0_4 = arith.constant 0 : index
    %c0_5 = arith.constant 0 : index
    %7 = vector.load %arg1[%c0_4, %c0_5] : memref<32x2xf32, #tpu.memory_space<vmem>>, vector<32x2xf32>
    %c0_6 = arith.constant 0 : index
    %c0_7 = arith.constant 0 : index
    %8 = vector.load %arg2[%c0_6, %c0_7] : memref<1x2xf32, #tpu.memory_space<vmem>>, vector<1x2xf32>
    %c0_8 = arith.constant 0 : index
    %c0_9 = arith.constant 0 : index
    %9 = vector.load %arg3[%c0_8, %c0_9] : memref<32x2xf32, #tpu.memory_space<vmem>>, vector<32x2xf32>
    %c0_10 = arith.constant 0 : index
    %c0_11 = arith.constant 0 : index
    %10 = vector.load %arg4[%c0_10, %c0_11] : memref<32x1xf32, #tpu.memory_space<vmem>>, vector<32x1xf32>
    %11 = vector.shape_cast %7 : vector<32x2xf32> to vector<1x32x2xf32>
    %12 = vector.broadcast %4 : vector<1x32x1xf32> to vector<1x32x2xf32>
    %13 = arith.mulf %11, %12 : vector<1x32x2xf32>
    %cst_12 = arith.constant dense<0.000000e+00> : vector<1x2xf32>
    %14 = vector.multi_reduction <add>, %13, %cst_12 [1] : vector<1x32x2xf32> to vector<1x2xf32>
    %15 = vector.shape_cast %14 : vector<1x2xf32> to vector<1x1x2xf32>
    %16 = vector.shape_cast %8 : vector<1x2xf32> to vector<1x1x2xf32>
    %17 = arith.addf %15, %16 : vector<1x1x2xf32>
    %cst_13 = arith.constant 0.000000e+00 : f32
    %18 = vector.broadcast %cst_13 : f32 to vector<1x1x2xf32>
    %19 = arith.maximumf %17, %18 : vector<1x1x2xf32>
    %20 = vector.shape_cast %9 : vector<32x2xf32> to vector<1x32x2xf32>
    %21 = vector.broadcast %19 : vector<1x1x2xf32> to vector<1x32x2xf32>
    %22 = arith.mulf %20, %21 : vector<1x32x2xf32>
    %cst_14 = arith.constant dense<0.000000e+00> : vector<1x32xf32>
    %23 = vector.multi_reduction <add>, %22, %cst_14 [2] : vector<1x32x2xf32> to vector<1x32xf32>
    %24 = vector.shape_cast %23 : vector<1x32xf32> to vector<1x32x1xf32>
    %25 = vector.shape_cast %10 : vector<32x1xf32> to vector<1x32x1xf32>
    %26 = arith.addf %24, %25 : vector<1x32x1xf32>
    %27 = vector.shape_cast %7 : vector<32x2xf32> to vector<1x32x2xf32>
    %28 = vector.broadcast %6 : vector<1x32x1xf32> to vector<1x32x2xf32>
    %29 = arith.mulf %27, %28 : vector<1x32x2xf32>
    %cst_15 = arith.constant dense<0.000000e+00> : vector<1x2xf32>
    %30 = vector.multi_reduction <add>, %29, %cst_15 [1] : vector<1x32x2xf32> to vector<1x2xf32>
    %31 = vector.shape_cast %30 : vector<1x2xf32> to vector<1x1x2xf32>
    %32 = vector.shape_cast %8 : vector<1x2xf32> to vector<1x1x2xf32>
    %33 = arith.addf %31, %32 : vector<1x1x2xf32>
    %cst_16 = arith.constant 0.000000e+00 : f32
    %34 = vector.broadcast %cst_16 : f32 to vector<1x1x2xf32>
    %35 = arith.maximumf %33, %34 : vector<1x1x2xf32>
    %36 = vector.shape_cast %9 : vector<32x2xf32> to vector<1x32x2xf32>
    %37 = vector.broadcast %35 : vector<1x1x2xf32> to vector<1x32x2xf32>
    %38 = arith.mulf %36, %37 : vector<1x32x2xf32>
    %cst_17 = arith.constant dense<0.000000e+00> : vector<1x32xf32>
    %39 = vector.multi_reduction <add>, %38, %cst_17 [2] : vector<1x32x2xf32> to vector<1x32xf32>
    %40 = vector.shape_cast %39 : vector<1x32xf32> to vector<1x32x1xf32>
    %41 = vector.shape_cast %10 : vector<32x1xf32> to vector<1x32x1xf32>
    %42 = arith.addf %40, %41 : vector<1x32x1xf32>
    %43 = arith.addf %26, %42 : vector<1x32x1xf32>
    %44 = arith.negf %43 : vector<1x32x1xf32>
    %45 = math.exp %44 : vector<1x32x1xf32>
    %cst_18 = arith.constant 1.000000e+00 : f32
    %46 = vector.broadcast %cst_18 : f32 to vector<1x32x1xf32>
    %47 = arith.addf %46, %45 : vector<1x32x1xf32>
    %48 = arith.divf %46, %47 : vector<1x32x1xf32>
    %49 = vector.broadcast %48 : vector<1x32x1xf32> to vector<1x32x256xf32>
    %50 = arith.mulf %0, %49 : vector<1x32x256xf32>
    %c0_19 = arith.constant 0 : index
    %c0_20 = arith.constant 0 : index
    %c0_21 = arith.constant 0 : index
    %51 = vector.load %arg6[%c0_19, %c0_20, %c0_21] : memref<1x32x256xf32, #tpu.memory_space<vmem>>, vector<1x32x256xf32>
    tpu.vector_store %arg6[%c0_19, %c0_20, %c0_21], %50 {strides = array<i32>} : memref<1x32x256xf32, #tpu.memory_space<vmem>>, vector<1x32x256xf32>,
    return
  }
  func.func @transform_0(%arg0: i32) -> (i32, i32) {
    %c0_i32 = arith.constant 0 : i32
    %c0_i32_0 = arith.constant 0 : i32
    %c0_i32_1 = arith.constant 0 : i32
    return %c0_i32, %c0_i32_0 : i32, i32
  }
  func.func @transform_1(%arg0: i32) -> (i32, i32) {
    %c0_i32 = arith.constant 0 : i32
    %c0_i32_0 = arith.constant 0 : i32
    %c0_i32_1 = arith.constant 0 : i32
    return %c0_i32, %c0_i32_0 : i32, i32
  }
  func.func @transform_2(%arg0: i32) -> (i32, i32) {
    %c0_i32 = arith.constant 0 : i32
    %c0_i32_0 = arith.constant 0 : i32
    %c0_i32_1 = arith.constant 0 : i32
    return %c0_i32, %c0_i32_0 : i32, i32
  }
  func.func @transform_3(%arg0: i32) -> (i32, i32) {
    %c0_i32 = arith.constant 0 : i32
    %c0_i32_0 = arith.constant 0 : i32
    %c0_i32_1 = arith.constant 0 : i32
    return %c0_i32, %c0_i32_0 : i32, i32
  }
  func.func @transform_4(%arg0: i32) -> (i32, i32, i32) {
    %c0_i32 = arith.constant 0 : i32
    %c0_i32_0 = arith.constant 0 : i32
    %c0_i32_1 = arith.constant 0 : i32
    return %arg0, %c0_i32, %c0_i32_0 : i32, i32, i32
  }
  func.func @transform_5(%arg0: i32) -> (i32, i32, i32) {
    %c0_i32 = arith.constant 0 : i32
    %c0_i32_0 = arith.constant 0 : i32
    %c0_i32_1 = arith.constant 0 : i32
    return %arg0, %c0_i32, %c0_i32_0 : i32, i32, i32
  }
}

</mosaic_0001>

<llo_original>
// kernel: channel_attention.1
$region0: #{channel_attention.1}
  #allocation0 [shape = 'u32[]', space=smem, size = 0x4, offset = 0x4, fixed_abs, tag = 'smem constant byte address 0x4 - core index']
  #allocation1 [shape = 'u32[144,128]{1,0:T(1,128)}', space=vmem, size = 0x12000, scoped, tag = 'internal scratch']
  %s0 = inlined_call_operand.vmem [shape: f32[32,2], index: 0, kind: input, shape index: {}]
  %s1 = inlined_call_operand.vmem [shape: f32[1,2], index: 1, kind: input, shape index: {}]
  %s2 = inlined_call_operand.vmem [shape: f32[32,2], index: 2, kind: input, shape index: {}]
  %s3 = inlined_call_operand.vmem [shape: f32[32,1], index: 3, kind: input, shape index: {}]
  %s4 = inlined_call_operand.vmem [shape: f32[2,32,256], index: 4, kind: input, shape index: {}]
  %s5 = inlined_call_operand.vmem [shape: f32[2,32,256], index: 5, kind: output, shape index: {}]
  %s6 = sld [smem:[#allocation0]]
  $region53: #{channel_attention.1} parent=0
    _
  %s8 = ssub.s32 1, %s6
  %s9 = scalar_select 0, %s8, %s6
  loop: start=0, step=1, limit=4
  $region2: #{channel_attention.1} parent=0 // loop_pre_header
    _
  $region3: #{channel_attention.1} parent=0 // loop_header
    %s11 = sphi 0, %s15
    %p12 = scmp.ge.s32.totalorder %s11, 4
    %s19 = sphi 0, %s19
    %s21 = sphi 0, %s19
    %s22 = sphi 0, %s21
    %s36 = sphi 0, %s22
    %s40 = sphi 0, %s40
    %s42 = sphi 0, %s40
    %s43 = sphi 0, %s42
    %s57 = sphi 0, %s43
    %s61 = sphi 0, %s61
    %s63 = sphi 0, %s61
    %s64 = sphi 0, %s63
    %s78 = sphi 0, %s64
    %s82 = sphi 0, %s82
    %s84 = sphi 0, %s82
    %s85 = sphi 0, %s84
    %s99 = sphi 0, %s85
    %s105 = sphi 0, %s107
    %s108 = sphi 0, %s105
    %s109 = sphi 0, %s108
    %s125 = sphi 0, %s109
    %s131 = sphi 0, %s133
    %s134 = sphi 0, %s131
    %s135 = sphi 0, %s134
    %s151 = sphi 0, %s135
  $region4: #{channel_attention.1} parent=0 // loop_header_branch
    %14 = sbr.rel (%p12) target = $region8
  $region5: #{channel_attention.1} parent=0 // loop_body
    %s16 = ssub.s32 %s11, 1
    %s17 = ssub.s32 %s11, 2
    %s18 = sadd.s32 %s11, 1
    %s20 = sadd.s32 %s19, 1
    %p23 = scmp.eq.s32.totalorder %s11, 1
    %p24 = scmp.ne.s32.totalorder %s19, %s21
    %p25 = scmp.eq.s32.totalorder %s11, 0
    %p26 = por %p24, %p25
    %p27 = scmp.ne.s32.totalorder %s19, %s21
    %p28 = scmp.eq.s32.totalorder %s16, 1
    %p29 = por %p27, %p28
    %p30 = scmp.ne.s32.totalorder %s21, %s22
    %p31 = scmp.eq.s32.totalorder %s16, 0
    %p32 = por %p30, %p31
    %p33 = scmp.ne.s32.totalorder %s21, %s22
    %p34 = scmp.eq.s32.totalorder %s17, 1
    %p35 = por %p33, %p34
    %p37 = scmp.ne.s32.totalorder %s22, %s36
    %p38 = scmp.eq.s32.totalorder %s17, 0
    %p39 = por %p37, %p38
    %s41 = sadd.s32 %s40, 1
    %p44 = scmp.eq.s32.totalorder %s11, 1
    %p45 = scmp.ne.s32.totalorder %s40, %s42
    %p46 = scmp.eq.s32.totalorder %s11, 0
    %p47 = por %p45, %p46
    %p48 = scmp.ne.s32.totalorder %s40, %s42
    %p49 = scmp.eq.s32.totalorder %s16, 1
    %p50 = por %p48, %p49
    %p51 = scmp.ne.s32.totalorder %s42, %s43
    %p52 = scmp.eq.s32.totalorder %s16, 0
    %p53 = por %p51, %p52
    %p54 = scmp.ne.s32.totalorder %s42, %s43
    %p55 = scmp.eq.s32.totalorder %s17, 1
    %p56 = por %p54, %p55
    %p58 = scmp.ne.s32.totalorder %s43, %s57
    %p59 = scmp.eq.s32.totalorder %s17, 0
    %p60 = por %p58, %p59
    %s62 = sadd.s32 %s61, 1
    %p65 = scmp.eq.s32.totalorder %s11, 1
    %p66 = scmp.ne.s32.totalorder %s61, %s63
    %p67 = scmp.eq.s32.totalorder %s11, 0
    %p68 = por %p66, %p67
    %p69 = scmp.ne.s32.totalorder %s61, %s63
    %p70 = scmp.eq.s32.totalorder %s16, 1
    %p71 = por %p69, %p70
    %p72 = scmp.ne.s32.totalorder %s63, %s64
    %p73 = scmp.eq.s32.totalorder %s16, 0
    %p74 = por %p72, %p73
    %p75 = scmp.ne.s32.totalorder %s63, %s64
    %p76 = scmp.eq.s32.totalorder %s17, 1
    %p77 = por %p75, %p76
    %p79 = scmp.ne.s32.totalorder %s64, %s78
    %p80 = scmp.eq.s32.totalorder %s17, 0
    %p81 = por %p79, %p80
    %s83 = sadd.s32 %s82, 1
    %p86 = scmp.eq.s32.totalorder %s11, 1
    %p87 = scmp.ne.s32.totalorder %s82, %s84
    %p88 = scmp.eq.s32.totalorder %s11, 0
    %p89 = por %p87, %p88
    %p90 = scmp.ne.s32.totalorder %s82, %s84
    %p91 = scmp.eq.s32.totalorder %s16, 1
    %p92 = por %p90, %p91
    %p93 = scmp.ne.s32.totalorder %s84, %s85
    %p94 = scmp.eq.s32.totalorder %s16, 0
    %p95 = por %p93, %p94
    %p96 = scmp.ne.s32.totalorder %s84, %s85
    %p97 = scmp.eq.s32.totalorder %s17, 1
    %p98 = por %p96, %p97
    %p100 = scmp.ne.s32.totalorder %s85, %s99
    %p101 = scmp.eq.s32.totalorder %s17, 0
    %p102 = por %p100, %p101
    %s103 = ssub.s32 %s11, %s18
    %p104 = scmp.eq.s32.totalorder %s103, 0
    %s106 = sadd.s32 %s105, 1
    %s107 = scalar_select %p104, %s105, %s106
    %p110 = pneg %p104
    %p111 = scmp.eq.s32.totalorder %s11, 1
    %p112 = por %p110, %p111
    %p113 = scmp.ne.s32.totalorder %s105, %s108
    %p114 = scmp.eq.s32.totalorder %s11, 0
    %p115 = por %p113, %p114
    %p116 = scmp.ne.s32.totalorder %s105, %s108
    %p117 = scmp.eq.s32.totalorder %s16, 1
    %p118 = por %p116, %p117
    %p119 = scmp.ne.s32.totalorder %s108, %s109
    %p120 = scmp.eq.s32.totalorder %s16, 0
    %p121 = por %p119, %p120
    %p122 = scmp.ne.s32.totalorder %s108, %s109
    %p123 = scmp.eq.s32.totalorder %s17, 1
    %p124 = por %p122, %p123
    %p126 = scmp.ne.s32.totalorder %s109, %s125
    %p127 = scmp.eq.s32.totalorder %s17, 0
    %p128 = por %p126, %p127
    %s129 = ssub.s32 %s11, %s18
    %p130 = scmp.eq.s32.totalorder %s129, 0
    %s132 = sadd.s32 %s131, 1
    %s133 = scalar_select %p130, %s131, %s132
    %p136 = pneg %p130
    %p137 = scmp.eq.s32.totalorder %s11, 1
    %p138 = por %p136, %p137
    %p139 = scmp.ne.s32.totalorder %s131, %s134
    %p140 = scmp.eq.s32.totalorder %s11, 0
    %p141 = por %p139, %p140
    %p142 = scmp.ne.s32.totalorder %s131, %s134
    %p143 = scmp.eq.s32.totalorder %s16, 1
    %p144 = por %p142, %p143
    %p145 = scmp.ne.s32.totalorder %s134, %s135
    %p146 = scmp.eq.s32.totalorder %s16, 0
    %p147 = por %p145, %p146
    %p148 = scmp.ne.s32.totalorder %s134, %s135
    %p149 = scmp.eq.s32.totalorder %s17, 1
    %p150 = por %p148, %p149
    %p152 = scmp.ne.s32.totalorder %s135, %s151
    %p153 = scmp.eq.s32.totalorder %s17, 0
    %p154 = por %p152, %p153
    %p155 = scmp.le.s32.totalorder 1, %s11
    %p156 = scmp.lt.s32.totalorder %s11, 3
    %p157 = pnand %p155, %p156
    %p158 = pneg %p157
    // Predicated region
    $region9: #{channel_attention.1} parent=5 // pred_check
      _
    $region10: #{channel_attention.1} parent=5 // pred_check_branch
      %160 = sbr.rel (%p157) target = $region12
    $region11: #{channel_attention.1} parent=5 // pred_region
      %s161 = ssub.s32 %s11, 1
      // Predicated region
      $region13: #{channel_attention.1} parent=11 // pred_check
        %p162 = pneg %p32
      $region14: #{channel_attention.1} parent=11 // pred_check_branch
        %164 = sbr.rel (%p162) target = $region16
      $region15: #{channel_attention.1} parent=11 // pred_region
        _
      $region16: #{channel_attention.1} parent=11 // pred_fallthru
        _
      // Predicated region
      $region17: #{channel_attention.1} parent=11 // pred_check
        %p165 = pneg %p53
      $region18: #{channel_attention.1} parent=11 // pred_check_branch
        %167 = sbr.rel (%p165) target = $region20
      $region19: #{channel_attention.1} parent=11 // pred_region
        _
      $region20: #{channel_attention.1} parent=11 // pred_fallthru
        _
      // Predicated region
      $region21: #{channel_attention.1} parent=11 // pred_check
        %p168 = pneg %p74
      $region22: #{channel_attention.1} parent=11 // pred_check_branch
        %170 = sbr.rel (%p168) target = $region24
      $region23: #{channel_attention.1} parent=11 // pred_region
        _
      $region24: #{channel_attention.1} parent=11 // pred_fallthru
        _
      // Predicated region
      $region25: #{channel_attention.1} parent=11 // pred_check
        %p171 = pneg %p95
      $region26: #{channel_attention.1} parent=11 // pred_check_branch
        %173 = sbr.rel (%p171) target = $region28
      $region27: #{channel_attention.1} parent=11 // pred_region
        _
      $region28: #{channel_attention.1} parent=11 // pred_fallthru
        _
    $region12: #{channel_attention.1} parent=5 // pred_fallthru
      _
    %p174 = scmp.lt.s32.totalorder %s11, 2
    // Predicated region
    $region29: #{channel_attention.1} parent=5 // pred_check
      %p175 = pneg %p174
    $region30: #{channel_attention.1} parent=5 // pred_check_branch
      %177 = sbr.rel (%p175) target = $region32
    $region31: #{channel_attention.1} parent=5 // pred_region
      // Predicated region
      $region33: #{channel_attention.1} parent=31 // pred_check
        %p178 = pneg %p115
      $region34: #{channel_attention.1} parent=31 // pred_check_branch
        %180 = sbr.rel (%p178) target = $region36
      $region35: #{channel_attention.1} parent=31 // pred_region
        %p181 = scmp.lt.s32.totalorder %s11, 1
        %s182 = scalar_select %p181, %s11, 1
        %s183 = smul.addr %s182, 8
        %s184 = smul.addr %s183, 8
        %s185 = scalar_lea.vmem %s4, %s184
      $region36: #{channel_attention.1} parent=31 // pred_fallthru
        _
    $region32: #{channel_attention.1} parent=5 // pred_fallthru
      _
    %p186 = scmp.le.s32.totalorder 1, %s11
    %p187 = scmp.lt.s32.totalorder %s11, 3
    %p188 = pnand %p186, %p187
    %p189 = pneg %p188
    // Predicated region
    $region37: #{channel_attention.1} parent=5 // pred_check
      _
    $region38: #{channel_attention.1} parent=5 // pred_check_branch
      %191 = sbr.rel (%p188) target = $region40
    $region39: #{channel_attention.1} parent=5 // pred_region
      %s192 = ssub.s32 %s11, 1
      %p193 = pneg %p32
      %p194 = pneg %p29
      %p195 = pneg %p53
      %p196 = pneg %p50
      %p197 = pneg %p74
      %p198 = pneg %p71
      %p199 = pneg %p95
      %p200 = pneg %p92
      %p201 = scmp.lt.s32.totalorder %s16, 1
      %s202 = scalar_select %p201, %s16, 1
      %s203 = smul.addr %s202, 8
      %s204 = smul.addr %s203, 8
      %s205 = scalar_lea.vmem %s4, %s204
      %p206 = pneg %p121
      %p207 = pneg %p118
      %p208 = pneg %p147
      %p209 = pneg %p144
      %p210 = scmp.lt.s32.totalorder %s16, 1
      %s211 = scalar_select %p210, %s16, 1
      %s212 = smul.addr %s211, 8
      %s213 = smul.addr %s212, 8
      %s214 = scalar_lea.vmem %s5, %s213
      %p215 = scmp.lt.s32.totalorder %s16, 1
      %s216 = scalar_select %p215, %s16, 1
      %s217 = smul.addr %s216, 8
      %s218 = smul.addr %s217, 8
      %s219 = scalar_lea.vmem %s4, %s218
      %p220 = scmp.lt.s32.totalorder %s16, 1
      %s221 = scalar_select %p220, %s16, 1
      %s222 = smul.addr %s221, 8
      %s223 = smul.addr %s222, 8
      %s224 = scalar_lea.vmem %s5, %s223
      %v225 = vld [vmem:[%s219] sm:$0xff]
      %v226 = vld [vmem:[%s219 + $0x8] sm:$0xff]
      %v227 = vld [vmem:[%s219 + $0x10] sm:$0xff]
      %v228 = vld [vmem:[%s219 + $0x18] sm:$0xff]
      %v229 = vld [vmem:[%s219 + $0x20] sm:$0xff]
      %v230 = vld [vmem:[%s219 + $0x28] sm:$0xff]
      %v231 = vld [vmem:[%s219 + $0x30] sm:$0xff]
      %v232 = vld [vmem:[%s219 + $0x38] sm:$0xff]
      %v233 = vadd.f32 %v225, %v226
      %234 = vadd.xlane.f32.xlu0 %v233
      %v235 = vpop.xlane.xlu0 %234
      %v236 = vadd.f32 %v227, %v228
      %237 = vadd.xlane.f32.xlu0 %v236
      %v238 = vpop.xlane.xlu0 %237
      %v239 = vadd.f32 %v229, %v230
      %240 = vadd.xlane.f32.xlu0 %v239
      %v241 = vpop.xlane.xlu0 %240
      %v242 = vadd.f32 %v231, %v232
      %243 = vadd.xlane.f32.xlu0 %v242
      %v244 = vpop.xlane.xlu0 %243
      %v245 = vmul.f32 %v235, 0.00390625
      %v246 = vmul.f32 %v238, 0.00390625
      %v247 = vmul.f32 %v241, 0.00390625
      %v248 = vmul.f32 %v244, 0.00390625
      %v249 = vmax.f32 %v225, %v226
      %250 = vmax.xlane.f32.xlu0 %v249
      %v251 = vpop.xlane.xlu0 %250
      %v252 = vmax.f32 %v227, %v228
      %253 = vmax.xlane.f32.xlu0 %v252
      %v254 = vpop.xlane.xlu0 %253
      %v255 = vmax.f32 %v229, %v230
      %256 = vmax.xlane.f32.xlu0 %v255
      %v257 = vpop.xlane.xlu0 %256
      %v258 = vmax.f32 %v231, %v232
      %259 = vmax.xlane.f32.xlu0 %v258
      %v260 = vpop.xlane.xlu0 %259
      %v261 = vld [vmem:[%s0] sm:$0xff]
      %v262 = vld [vmem:[%s0 + $0x8] sm:$0xff]
      %v263 = vld [vmem:[%s0 + $0x10] sm:$0xff]
      %v264 = vld [vmem:[%s0 + $0x18] sm:$0xff]
      %v265 = vld [vmem:[%s1] sm:$0x1]
      %v266 = vld [vmem:[%s2] sm:$0xff]
      %v267 = vld [vmem:[%s2 + $0x8] sm:$0xff]
      %v268 = vld [vmem:[%s2 + $0x10] sm:$0xff]
      %v269 = vld [vmem:[%s2 + $0x18] sm:$0xff]
      %v270 = vld [vmem:[%s3] sm:$0xff]
      %v271 = vld [vmem:[%s3 + $0x8] sm:$0xff]
      %v272 = vld [vmem:[%s3 + $0x10] sm:$0xff]
      %v273 = vld [vmem:[%s3 + $0x18] sm:$0xff]
      %v274 = vmul.f32 %v261, %v245
      %v275 = vmul.f32 %v262, %v246
      %v276 = vmul.f32 %v263, %v247
      %v277 = vmul.f32 %v264, %v248
      %vm278 = vcmask 15360
      %v279 = vsel %vm278, %v274, 0.0
      %v280 = vsel %vm278, %v275, 0.0
      %v281 = vadd.f32 %v279, %v280
      %v282 = vsel %vm278, %v276, 0.0
      %v283 = vadd.f32 %v281, %v282
      %v284 = vsel %vm278, %v277, 0.0
      %v285 = vadd.f32 %v283, %v284
      %v286 = vrot.slane %v285, 4
      %v287 = vadd.f32 %v285, %v286
      %v288 = vrot.slane %v287, 2
      %v289 = vadd.f32 %v287, %v288
      %v290 = vrot.slane %v289, 1
      %v291 = vadd.f32 %v289, %v290
      %v292 = vadd.f32 %v291, %v265
      %v293 = vmax.f32 %v292, 0.0
      %v294 = vlaneseq
      %v295 = vshrl.u32 %v294, 7
      %v296 = vsub.s32 0, %v295
      %v297 = vrot.slane %v293, %v296
      %v298 = vmul.f32 %v266, %v297
      %v299 = vmul.f32 %v267, %v297
      %v300 = vmul.f32 %v268, %v297
      %v301 = vmul.f32 %v269, %v297
      %v302 = vsel %vm278, %v298, 0.0
      %303 = vadd.xlane.f32.xlu0 %v302
      %v304 = vpop.xlane.xlu0 %303
      %v305 = vsel %vm278, %v299, 0.0
      %306 = vadd.xlane.f32.xlu0 %v305
      %v307 = vpop.xlane.xlu0 %306
      %v308 = vsel %vm278, %v300, 0.0
      %309 = vadd.xlane.f32.xlu0 %v308
      %v310 = vpop.xlane.xlu0 %309
      %v311 = vsel %vm278, %v301, 0.0
      %312 = vadd.xlane.f32.xlu0 %v311
      %v313 = vpop.xlane.xlu0 %312
      %v314 = vadd.f32 %v304, %v270
      %v315 = vadd.f32 %v307, %v271
      %v316 = vadd.f32 %v310, %v272
      %v317 = vadd.f32 %v313, %v273
      %v318 = vmul.f32 %v261, %v251
      %v319 = vmul.f32 %v262, %v254
      %v320 = vmul.f32 %v263, %v257
      %v321 = vmul.f32 %v264, %v260
      %v322 = vsel %vm278, %v318, 0.0
      %v323 = vsel %vm278, %v319, 0.0
      %v324 = vadd.f32 %v322, %v323
      %v325 = vsel %vm278, %v320, 0.0
      %v326 = vadd.f32 %v324, %v325
      %v327 = vsel %vm278, %v321, 0.0
      %v328 = vadd.f32 %v326, %v327
      %v329 = vrot.slane %v328, 4
      %v330 = vadd.f32 %v328, %v329
      %v331 = vrot.slane %v330, 2
      %v332 = vadd.f32 %v330, %v331
      %v333 = vrot.slane %v332, 1
      %v334 = vadd.f32 %v332, %v333
      %v335 = vadd.f32 %v334, %v265
      %v336 = vmax.f32 %v335, 0.0
      %v337 = vlaneseq
      %v338 = vshrl.u32 %v337, 7
      %v339 = vsub.s32 0, %v338
      %v340 = vrot.slane %v336, %v339
      %v341 = vmul.f32 %v266, %v340
      %v342 = vmul.f32 %v267, %v340
      %v343 = vmul.f32 %v268, %v340
      %v344 = vmul.f32 %v269, %v340
      %v345 = vsel %vm278, %v341, 0.0
      %346 = vadd.xlane.f32.xlu0 %v345
      %v347 = vpop.xlane.xlu0 %346
      %v348 = vsel %vm278, %v342, 0.0
      %349 = vadd.xlane.f32.xlu0 %v348
      %v350 = vpop.xlane.xlu0 %349
      %v351 = vsel %vm278, %v343, 0.0
      %352 = vadd.xlane.f32.xlu0 %v351
      %v353 = vpop.xlane.xlu0 %352
      %v354 = vsel %vm278, %v344, 0.0
      %355 = vadd.xlane.f32.xlu0 %v354
      %v356 = vpop.xlane.xlu0 %355
      %v357 = vadd.f32 %v347, %v270
      %v358 = vadd.f32 %v350, %v271
      %v359 = vadd.f32 %v353, %v272
      %v360 = vadd.f32 %v356, %v273
      %v361 = vadd.f32 %v314, %v357
      %v362 = vadd.f32 %v315, %v358
      %v363 = vadd.f32 %v316, %v359
      %v364 = vadd.f32 %v317, %v360
      %v365 = vxor.u32 %v361, 2147483648
      %v366 = vxor.u32 %v362, 2147483648
      %v367 = vxor.u32 %v363, 2147483648
      %v368 = vxor.u32 %v364, 2147483648
      %v369 = vmul.f32 %v365, 1.442695
      %v370 = vpow.pop %v369
      %v371 = vmul.f32 %v366, 1.442695
      %v372 = vpow.pop %v371
      %v373 = vmul.f32 %v367, 1.442695
      %v374 = vpow.pop %v373
      %v375 = vmul.f32 %v368, 1.442695
      %v376 = vpow.pop %v375
      %v377 = vadd.f32 %v370, 1.0
      %v378 = vadd.f32 %v372, 1.0
      %v379 = vadd.f32 %v374, 1.0
      %v380 = vadd.f32 %v376, 1.0
      %v381 = vrcp.pop %v377
      %v382 = vmul.f32 1.0, %v381
      %v383 = vrcp.pop %v378
      %v384 = vmul.f32 1.0, %v383
      %v385 = vrcp.pop %v379
      %v386 = vmul.f32 1.0, %v385
      %v387 = vrcp.pop %v380
      %v388 = vmul.f32 1.0, %v387
      %390 = vset.pattern.permute.xlu0 0
      %391 = vperm.xlu0 %390, %v382
      %v392 = vpop.permute.xlu0 %391
      %395 = vset.pattern.permute.xlu0 0
      %396 = vperm.xlu0 %395, %v384
      %v397 = vpop.permute.xlu0 %396
      %400 = vset.pattern.permute.xlu0 0
      %401 = vperm.xlu0 %400, %v386
      %v402 = vpop.permute.xlu0 %401
      %405 = vset.pattern.permute.xlu0 0
      %406 = vperm.xlu0 %405, %v388
      %v407 = vpop.permute.xlu0 %406
      %v409 = vmul.f32 %v225, %v392
      %v410 = vmul.f32 %v226, %v392
      %v411 = vmul.f32 %v227, %v397
      %v412 = vmul.f32 %v228, %v397
      %v413 = vmul.f32 %v229, %v402
      %v414 = vmul.f32 %v230, %v402
      %v415 = vmul.f32 %v231, %v407
      %v416 = vmul.f32 %v232, %v407
      %417 = vst [vmem:[%s224] sm:$0xff] %v409
      %418 = vst [vmem:[%s224 + $0x8] sm:$0xff] %v410
      %419 = vst [vmem:[%s224 + $0x10] sm:$0xff] %v411
      %420 = vst [vmem:[%s224 + $0x18] sm:$0xff] %v412
      %421 = vst [vmem:[%s224 + $0x20] sm:$0xff] %v413
      %422 = vst [vmem:[%s224 + $0x28] sm:$0xff] %v414
      %423 = vst [vmem:[%s224 + $0x30] sm:$0xff] %v415
      %424 = vst [vmem:[%s224 + $0x38] sm:$0xff] %v416
      %p425 = scmp.lt.s32.totalorder %s16, 1
      %s426 = scalar_select %p425, %s16, 1
      %s427 = smul.addr %s426, 8
      %s428 = smul.addr %s427, 8
      %s429 = scalar_lea.vmem %s5, %s428
      // Predicated region
      $region41: #{channel_attention.1} parent=39 // pred_check
        %p430 = pneg %p144
      $region42: #{channel_attention.1} parent=39 // pred_check_branch
        %432 = sbr.rel (%p430) target = $region44
      $region43: #{channel_attention.1} parent=39 // pred_region
        _
      $region44: #{channel_attention.1} parent=39 // pred_fallthru
        _
    $region40: #{channel_attention.1} parent=5 // pred_fallthru
      _
    %p433 = scmp.le.s32.totalorder 2, %s11
    // Predicated region
    $region45: #{channel_attention.1} parent=5 // pred_check
      %p434 = pneg %p433
    $region46: #{channel_attention.1} parent=5 // pred_check_branch
      %436 = sbr.rel (%p434) target = $region48
    $region47: #{channel_attention.1} parent=5 // pred_region
      %s437 = ssub.s32 %s11, 2
      // Predicated region
      $region49: #{channel_attention.1} parent=47 // pred_check
        %p438 = pneg %p150
      $region50: #{channel_attention.1} parent=47 // pred_check_branch
        %440 = sbr.rel (%p438) target = $region52
      $region51: #{channel_attention.1} parent=47 // pred_region
        %p441 = scmp.lt.s32.totalorder %s17, 1
        %s442 = scalar_select %p441, %s17, 1
        %s443 = smul.addr %s442, 8
        %s444 = smul.addr %s443, 8
        %s445 = scalar_lea.vmem %s5, %s444
      $region52: #{channel_attention.1} parent=47 // pred_fallthru
        _
    $region48: #{channel_attention.1} parent=5 // pred_fallthru
      _
  $region6: #{channel_attention.1} parent=0 // loop_footer
    %s15 = sadd.s32 1, %s11
  $region7: #{channel_attention.1} parent=0 // loop_footer_branch
    %10 = sbr.rel target = $region3
  $region8: #{channel_attention.1} parent=0 // loop_exit
    _

</llo_original>
